<compile_context>
chip_gen: v7x
topology: tpu7x:2x2x1
jax: 0.10.0
libtpu: 0.0.40
codegen_flags: <defaults>
</compile_context>

<pallas_src>
import functools
import math

import jax
import jax.numpy as jnp
from jax.experimental import pallas as pl
from jax.experimental.pallas import tpu as pltpu

EPS = 1e-12


# ----------------------------------------------------------------------------
# Kernel 1: per-(batch, channel) reciprocal L2 norm over time (read-only pass).
# ----------------------------------------------------------------------------
def recip_norm_kernel(x_ref, o_ref, *, eps, T, TT):
    """x_ref: (1, C, TT) time tile; o_ref: (1, C, 1) resident accumulator."""
    t = pl.program_id(1)

    @pl.when(t == 0)
    def _():
        o_ref[...] = jnp.zeros_like(o_ref)

    x = x_ref[...]
    # Mask the (possibly) partial last tile: out-of-range lanes hold garbage.
    col = t * TT + jax.lax.broadcasted_iota(jnp.int32, x.shape, 2)
    xm = jnp.where(col < T, x, 0.0)
    o_ref[...] += jnp.sum(xm * xm, axis=2, keepdims=True)

    @pl.when(t == pl.num_programs(1) - 1)
    def _():
        o_ref[...] = 1.0 / (jnp.sqrt(o_ref[...]) + eps)


# ----------------------------------------------------------------------------
# Kernel 2: fused normalize + im2col + (Conv_U * Conv_V) for one (b, frame tile).
# ----------------------------------------------------------------------------
def gated_conv_kernel(xt_ref, rck_ref, w_ref, o_ref, *, n_basis, Q, TJ):
    """xt_ref:  (1, C, stride, NCp) chunk-transposed x, xt[0,c,r,m] = x[b,c,m*stride+r]
    rck_ref: (1, 1, C*K)  per-column scale (recip[b, c] repeated K times)
    w_ref:   (2*NB, C*K)  [Wu; Wv], columns flattened as c*K + k
    o_ref:   (1, NB, TJ)  gated output tile out[b, :, j0:j0+TJ]
    """
    C = xt_ref.shape[1]
    j0 = pl.program_id(1) * TJ
    if TJ % 128 == 0:
        j0 = pl.multiple_of(j0, 128)

    # In-VMEM im2col: framesT[c*K + q*stride + r, j] = x[b, c, (j0+j+q)*stride + r].
    # Only contiguous (unit-stride) dynamic lane slices; concat is sublane-cheap.
    slabs = []
    for c in range(C):
        for q in range(Q):
            slabs.append(xt_ref[0, c, :, pl.ds(j0 + q, TJ)])     # (stride, TJ)
    frames_t = jnp.concatenate(slabs, axis=0)                    # (C*K, TJ)

    # Apply the 1/(||x||+eps) normalization to the weight columns (equivalent
    # to scaling x; ~2*NB*C*K VPU mults per tile, negligible vs the matmul).
    w_s = w_ref[...] * rck_ref[0]                                # (2*NB, C*K)

    # Single MXU matmul for both convs; f32 accumulation.
    y = jnp.dot(w_s, frames_t, preferred_element_type=jnp.float32)   # (2*NB, TJ)
    o_ref[0] = (y[:n_basis] * y[n_basis:]).astype(o_ref.dtype)


# ----------------------------------------------------------------------------
# Wrapper
# ----------------------------------------------------------------------------
def gated_encoder_forward(x, w_u, w_v, *, kernel_size=16, stride=8, eps=EPS):
    """x: (B, C, T); w_u/w_v: (n_basis, C, kernel_size) -> (B, n_basis, L_out)."""
    x = x.astype(jnp.float32)
    B, C, T = x.shape
    NB = w_u.shape[0]
    K = kernel_size
    L_out = (T - K) // stride + 1
    assert L_out >= 1, "signal shorter than kernel_size"
    # TODO(synk): in-kernel im2col assumes kernel_size % stride == 0 (the module
    # default 16/8); other ratios would need per-k strided slices.
    assert K % stride == 0
    Q = K // stride
    CK = C * K

    # ---- kernel 1: reciprocal L2 norms (tiny output, x read once) -----------
    TT = T if T <= 4096 else 4096
    nT = pl.cdiv(T, TT)
    recip = pl.pallas_call(
        functools.partial(recip_norm_kernel, eps=eps, T=T, TT=TT),
        out_shape=jax.ShapeDtypeStruct((B, C, 1), jnp.float32),
        grid=(B, nT),
        in_specs=[pl.BlockSpec((1, C, TT), lambda b, t: (b, 0, t))],
        out_specs=pl.BlockSpec((1, C, 1), lambda b, t: (b, 0, 0)),
        compiler_params=pltpu.CompilerParams(
            dimension_semantics=("parallel", "arbitrary")),
    )(x)

    # Tiny per-column scale vector: rck[b, 0, c*K + k] = recip[b, c].
    rck = jnp.repeat(recip[:, :, 0], K, axis=1).reshape(B, 1, CK)

    # ---- frame tiling --------------------------------------------------------
    if L_out <= 128:
        TJ = L_out                              # full dim -> legal block
    else:
        TJ = min(1024, (L_out // 128) * 128)    # lane-aligned tile
    nJ = pl.cdiv(L_out, TJ)

    # ---- chunk-transpose of x (input-sized XLA data movement only) ----------
    n_chunks = L_out - 1 + Q                    # chunks the conv actually touches
    NCp = nJ * TJ + (Q - 1)                     # padded so in-kernel slices stay in bounds
    x_c = x[:, :, : n_chunks * stride].reshape(B, C, n_chunks, stride)
    x_t = jnp.transpose(x_c, (0, 1, 3, 2))                       # (B, C, stride, n_chunks)
    x_t = jnp.pad(x_t, ((0, 0), (0, 0), (0, 0), (0, NCp - n_chunks)))

    # ---- weights: [Wu; Wv] flattened to (2*NB, C*K), grid-invariant ---------
    w_cat = jnp.concatenate(
        [w_u.reshape(NB, CK), w_v.reshape(NB, CK)], axis=0).astype(jnp.float32)

    # ---- kernel 2: fused im2col + gated conv, output directly (B, NB, L_out)
    out = pl.pallas_call(
        functools.partial(gated_conv_kernel, n_basis=NB, Q=Q, TJ=TJ),
        out_shape=jax.ShapeDtypeStruct((B, NB, L_out), jnp.float32),
        grid=(B, nJ),
        in_specs=[
            pl.BlockSpec((1, C, stride, NCp), lambda b, j: (b, 0, 0, 0)),  # x, per-batch resident
            pl.BlockSpec((1, 1, CK), lambda b, j: (b, 0, 0)),              # recip scales
            pl.BlockSpec((2 * NB, CK), lambda b, j: (0, 0)),               # weights, resident
        ],
        out_specs=pl.BlockSpec((1, NB, TJ), lambda b, j: (b, 0, j)),
        compiler_params=pltpu.CompilerParams(
            dimension_semantics=("parallel", "parallel"),
            vmem_limit_bytes=48 * 1024 * 1024),
    )(x_t, rck, w_cat)
    return out


# ----------------------------------------------------------------------------
# Pure-JAX reference (for correctness check)
# ----------------------------------------------------------------------------
def gated_encoder_ref(x, w_u, w_v, *, kernel_size=16, stride=8, eps=EPS):
    norm = jnp.sqrt(jnp.sum(x * x, axis=2, keepdims=True))
    xn = x / (norm + eps)
    dn = ("NCH", "OIH", "NCH")
    xu = jax.lax.conv_general_dilated(
        xn, w_u, (stride,), "VALID", dimension_numbers=dn,
        precision=jax.lax.Precision.HIGHEST)
    xv = jax.lax.conv_general_dilated(
        xn, w_v, (stride,), "VALID", dimension_numbers=dn,
        precision=jax.lax.Precision.HIGHEST)
    return xu * xv


# ----------------------------------------------------------------------------
if __name__ == "__main__":
    B, C_in, T = 2, 4, 64
    n_basis, kernel_size, stride = 32, 16, 8

    key = jax.random.PRNGKey(0)
    k_x, k_u, k_v = jax.random.split(key, 3)
    x = jax.random.normal(k_x, (B, C_in, T), jnp.float32)
    bound = 1.0 / math.sqrt(C_in * kernel_size)
    w_u = jax.random.uniform(k_u, (n_basis, C_in, kernel_size), jnp.float32, -bound, bound)
    w_v = jax.random.uniform(k_v, (n_basis, C_in, kernel_size), jnp.float32, -bound, bound)

    y = gated_encoder_forward(x, w_u, w_v, kernel_size=kernel_size, stride=stride)
    y = jax.block_until_ready(y)

    L_out = (T - kernel_size) // stride + 1
    assert y.shape == (B, n_basis, L_out), y.shape

    y_ref = jax.block_until_ready(
        gated_encoder_ref(x, w_u, w_v, kernel_size=kernel_size, stride=stride))
    assert jnp.allclose(y, y_ref, atol=1e-4, rtol=1e-3), \
        float(jnp.max(jnp.abs(y - y_ref)))

    print("KERNEL_OK")
</pallas_src>

<mosaic_0001>
module attributes {stable_mosaic.version = 11 : i64} {
  func.func @recip_norm_kernel(%arg0: i32, %arg1: i32, %arg2: memref<1x4x64xf32, #tpu.memory_space<vmem>>, %arg3: memref<1x4x1xf32, #tpu.memory_space<vmem>>) attributes {dimension_semantics = [#tpu.dimension_semantics<parallel>, #tpu.dimension_semantics<arbitrary>], iteration_bounds = array<i64: 2, 1>, scalar_prefetch = 0 : i64, scratch_operands = 0 : i64, tpu.core_type = #tpu.core_type<tc>, window_params = [{transform_indices = @transform_0, window_bounds = array<i64: 1, 4, 64>}, {transform_indices = @transform_1, window_bounds = array<i64: 1, 4, 1>}]} {
    %c0_i32 = arith.constant 0 : i32
    %0 = arith.cmpi eq, %arg1, %c0_i32 : i32
    %1 = arith.extui %0 : i1 to i32
    %c0_i32_0 = arith.constant 0 : i32
    %2 = arith.cmpi ne, %1, %c0_i32_0 : i32
    scf.if %2 {
      %cst_13 = arith.constant 0.000000e+00 : f32
      %21 = vector.broadcast %cst_13 : f32 to vector<1x4x1xf32>
      %c0_14 = arith.constant 0 : index
      %c0_15 = arith.constant 0 : index
      %c0_16 = arith.constant 0 : index
      %22 = vector.load %arg3[%c0_14, %c0_15, %c0_16] : memref<1x4x1xf32, #tpu.memory_space<vmem>>, vector<1x4x1xf32>
      tpu.vector_store %arg3[%c0_14, %c0_15, %c0_16], %21 {strides = array<i32>} : memref<1x4x1xf32, #tpu.memory_space<vmem>>, vector<1x4x1xf32>,
    } else {
    }
    %c0 = arith.constant 0 : index
    %c0_1 = arith.constant 0 : index
    %c0_2 = arith.constant 0 : index
    %3 = vector.load %arg2[%c0, %c0_1, %c0_2] : memref<1x4x64xf32, #tpu.memory_space<vmem>>, vector<1x4x64xf32>
    %c64_i32 = arith.constant 64 : i32
    %4 = arith.muli %arg1, %c64_i32 : i32
    %5 = tpu.iota {dimensions = array<i32: 2>} : vector<1x4x64xi32>
    %6 = vector.broadcast %4 : i32 to vector<1x4x64xi32>
    %7 = arith.addi %6, %5 : vector<1x4x64xi32>
    %c64_i32_3 = arith.constant 64 : i32
    %8 = vector.broadcast %c64_i32_3 : i32 to vector<1x4x64xi32>
    %9 = arith.cmpi slt, %7, %8 : vector<1x4x64xi32>
    %cst = arith.constant 0.000000e+00 : f32
    %10 = vector.broadcast %cst : f32 to vector<1x4x64xf32>
    %11 = arith.select %9, %3, %10 : vector<1x4x64xi1>, vector<1x4x64xf32>
    %c0_4 = arith.constant 0 : index
    %c0_5 = arith.constant 0 : index
    %c0_6 = arith.constant 0 : index
    %12 = vector.load %arg3[%c0_4, %c0_5, %c0_6] : memref<1x4x1xf32, #tpu.memory_space<vmem>>, vector<1x4x1xf32>
    %13 = arith.mulf %11, %11 : vector<1x4x64xf32>
    %cst_7 = arith.constant dense<0.000000e+00> : vector<1x4xf32>
    %14 = vector.multi_reduction <add>, %13, %cst_7 [2] : vector<1x4x64xf32> to vector<1x4xf32>
    %15 = vector.shape_cast %14 : vector<1x4xf32> to vector<1x4x1xf32>
    %16 = arith.addf %12, %15 : vector<1x4x1xf32>
    %c0_8 = arith.constant 0 : index
    %c0_9 = arith.constant 0 : index
    %c0_10 = arith.constant 0 : index
    %17 = vector.load %arg3[%c0_8, %c0_9, %c0_10] : memref<1x4x1xf32, #tpu.memory_space<vmem>>, vector<1x4x1xf32>
    tpu.vector_store %arg3[%c0_8, %c0_9, %c0_10], %16 {strides = array<i32>} : memref<1x4x1xf32, #tpu.memory_space<vmem>>, vector<1x4x1xf32>,
    %c0_i32_11 = arith.constant 0 : i32
    %18 = arith.cmpi eq, %arg1, %c0_i32_11 : i32
    %19 = arith.extui %18 : i1 to i32
    %c0_i32_12 = arith.constant 0 : i32
    %20 = arith.cmpi ne, %19, %c0_i32_12 : i32
    scf.if %20 {
      %c0_13 = arith.constant 0 : index
      %c0_14 = arith.constant 0 : index
      %c0_15 = arith.constant 0 : index
      %21 = vector.load %arg3[%c0_13, %c0_14, %c0_15] : memref<1x4x1xf32, #tpu.memory_space<vmem>>, vector<1x4x1xf32>
      %22 = math.sqrt %21 : vector<1x4x1xf32>
      %cst_16 = arith.constant 9.99999996E-13 : f32
      %23 = vector.broadcast %cst_16 : f32 to vector<1x4x1xf32>
      %24 = arith.addf %22, %23 : vector<1x4x1xf32>
      %cst_17 = arith.constant 1.000000e+00 : f32
      %25 = vector.broadcast %cst_17 : f32 to vector<1x4x1xf32>
      %26 = arith.divf %25, %24 : vector<1x4x1xf32>
      %c0_18 = arith.constant 0 : index
      %c0_19 = arith.constant 0 : index
      %c0_20 = arith.constant 0 : index
      %27 = vector.load %arg3[%c0_18, %c0_19, %c0_20] : memref<1x4x1xf32, #tpu.memory_space<vmem>>, vector<1x4x1xf32>
      tpu.vector_store %arg3[%c0_18, %c0_19, %c0_20], %26 {strides = array<i32>} : memref<1x4x1xf32, #tpu.memory_space<vmem>>, vector<1x4x1xf32>,
    } else {
    }
    return
  }
  func.func @transform_0(%arg0: i32, %arg1: i32) -> (i32, i32, i32) {
    %c0_i32 = arith.constant 0 : i32
    %c0_i32_0 = arith.constant 0 : i32
    return %arg0, %c0_i32, %arg1 : i32, i32, i32
  }
  func.func @transform_1(%arg0: i32, %arg1: i32) -> (i32, i32, i32) {
    %c0_i32 = arith.constant 0 : i32
    %c0_i32_0 = arith.constant 0 : i32
    %c0_i32_1 = arith.constant 0 : i32
    return %arg0, %c0_i32, %c0_i32_0 : i32, i32, i32
  }
}

</mosaic_0001>

<llo_original>
// kernel: tpu_custom_call.1
$region0: #{tpu_custom_call.1}
  #allocation0 [shape = 'u32[]', space=smem, size = 0x4, offset = 0x4, fixed_abs, tag = 'smem constant byte address 0x4 - core index']
  #allocation1 [shape = 'u32[144,128]{1,0:T(1,128)}', space=vmem, size = 0x12000, scoped, tag = 'internal scratch']
  %s0 = inlined_call_operand.hbm [shape: f32[2,4,64], index: 0, kind: input, shape index: {}]
  %s1 = inlined_call_operand.vmem [shape: f32[2,4,1], index: 1, kind: output, shape index: {}]
  %s2 = sld [smem:[#allocation0]]
  $region49: #{tpu_custom_call.1} parent=0
    _
  %s4 = ssub.s32 1, %s2
  %s5 = scalar_select 0, %s4, %s2
  $region1: #{tpu_custom_call.1} parent=0
    #allocation2 [shape = 'u8[4096]{0}', space=vmem, size = 0x1000, scoped, tag = 'input window, operand 0']
    #allocation3 [shape = 's32[2]{0}', space=sflag, size = 0x8, scoped, tag = 'scoped memory for tpu_custom_call.1']
    %6 = vsyncpa [#allocation3], 0
    %s7 = scalar_lea.sflag [#allocation3], 1
    %8 = vsyncpa %s7, 0
    loop: start=0, step=1, limit=4
    $region2: #{tpu_custom_call.1} parent=1 // loop_pre_header
      _
    $region3: #{tpu_custom_call.1} parent=1 // loop_header
      %s10 = sphi 0, %s14
      %p11 = scmp.ge.s32.totalorder %s10, 4
      %s17 = sphi 0, %s29
      %s18 = sphi 0, %s25
      %s19 = sphi 0, %s17
      %s20 = sphi 0, %s18
      %s21 = sphi 0, %s19
      %s22 = sphi 0, %s20
      %s34 = sphi 0, %s36
      %s37 = sphi 0, %s34
      %s38 = sphi 0, %s37
      %s54 = sphi 0, %s38
      %s60 = sphi 0, %s62
      %s63 = sphi 0, %s60
      %s64 = sphi 0, %s63
      %s80 = sphi 0, %s64
    $region4: #{tpu_custom_call.1} parent=1 // loop_header_branch
      %13 = sbr.rel (%p11) target = $region8
    $region5: #{tpu_custom_call.1} parent=1 // loop_body
      %s15 = ssub.s32 %s10, 1
      %s16 = ssub.s32 %s10, 2
      %s23 = sadd.s32 1, %s18
      %p24 = scmp.ge.s32.totalorder %s23, 1
      %s25 = scalar_select %p24, 0, %s23
      %s26 = sadd.s32 1, %s17
      %s27 = scalar_select %p24, %s26, %s17
      %p28 = scmp.ge.s32.totalorder %s27, 2
      %s29 = scalar_select %p28, 0, %s27
      %s30 = ssub.s32 %s17, %s29
      %s31 = ssub.s32 %s18, %s25
      %s32 = sor.u32 %s30, %s31
      %p33 = scmp.eq.s32.totalorder %s32, 0
      %s35 = sadd.s32 %s34, 1
      %s36 = scalar_select %p33, %s34, %s35
      %p39 = pneg %p33
      %p40 = scmp.eq.s32.totalorder %s10, 1
      %p41 = por %p39, %p40
      %p42 = scmp.ne.s32.totalorder %s34, %s37
      %p43 = scmp.eq.s32.totalorder %s10, 0
      %p44 = por %p42, %p43
      %p45 = scmp.ne.s32.totalorder %s34, %s37
      %p46 = scmp.eq.s32.totalorder %s15, 1
      %p47 = por %p45, %p46
      %p48 = scmp.ne.s32.totalorder %s37, %s38
      %p49 = scmp.eq.s32.totalorder %s15, 0
      %p50 = por %p48, %p49
      %p51 = scmp.ne.s32.totalorder %s37, %s38
      %p52 = scmp.eq.s32.totalorder %s16, 1
      %p53 = por %p51, %p52
      %p55 = scmp.ne.s32.totalorder %s38, %s54
      %p56 = scmp.eq.s32.totalorder %s16, 0
      %p57 = por %p55, %p56
      %s58 = ssub.s32 %s17, %s29
      %p59 = scmp.eq.s32.totalorder %s58, 0
      %s61 = sadd.s32 %s60, 1
      %s62 = scalar_select %p59, %s60, %s61
      %p65 = pneg %p59
      %p66 = scmp.eq.s32.totalorder %s10, 1
      %p67 = por %p65, %p66
      %p68 = scmp.ne.s32.totalorder %s60, %s63
      %p69 = scmp.eq.s32.totalorder %s10, 0
      %p70 = por %p68, %p69
      %p71 = scmp.ne.s32.totalorder %s60, %s63
      %p72 = scmp.eq.s32.totalorder %s15, 1
      %p73 = por %p71, %p72
      %p74 = scmp.ne.s32.totalorder %s63, %s64
      %p75 = scmp.eq.s32.totalorder %s15, 0
      %p76 = por %p74, %p75
      %p77 = scmp.ne.s32.totalorder %s63, %s64
      %p78 = scmp.eq.s32.totalorder %s16, 1
      %p79 = por %p77, %p78
      %p81 = scmp.ne.s32.totalorder %s64, %s80
      %p82 = scmp.eq.s32.totalorder %s16, 0
      %p83 = por %p81, %p82
      %p84 = scmp.le.s32.totalorder 1, %s10
      %p85 = scmp.lt.s32.totalorder %s10, 3
      %p86 = pnand %p84, %p85
      %p87 = pneg %p86
      // Predicated region
      $region9: #{tpu_custom_call.1} parent=5 // pred_check
        _
      $region10: #{tpu_custom_call.1} parent=5 // pred_check_branch
        %89 = sbr.rel (%p86) target = $region12
      $region11: #{tpu_custom_call.1} parent=5 // pred_region
        %s90 = ssub.s32 %s10, 1
      $region12: #{tpu_custom_call.1} parent=5 // pred_fallthru
        _
      %p91 = scmp.lt.s32.totalorder %s10, 2
      // Predicated region
      $region13: #{tpu_custom_call.1} parent=5 // pred_check
        %p92 = pneg %p91
      $region14: #{tpu_custom_call.1} parent=5 // pred_check_branch
        %94 = sbr.rel (%p92) target = $region16
      $region15: #{tpu_custom_call.1} parent=5 // pred_region
        // Predicated region
        $region17: #{tpu_custom_call.1} parent=15 // pred_check
          %p95 = pneg %p44
        $region18: #{tpu_custom_call.1} parent=15 // pred_check_branch
          %97 = sbr.rel (%p95) target = $region20
        $region19: #{tpu_custom_call.1} parent=15 // pred_region
          %s98 = sand.u32 %s34, 1
          %s99 = scalar_lea.sflag [#allocation3], %s98
          %s100 = sand.u32 %s34, 1
          %s101 = smul.addr %s100, 4
          %s102 = scalar_lea.vmem [#allocation2], %s101
          %s104 = ssub.s32 64, 64
          %105 = vsyncadd %s99, %s104
          %s106 = sadd.s32 %s18, %s17
          %s107 = smul.addr %s106, 64
          %s108 = scalar_lea.hbm %s0, %s107
          %s110 = sshll.u32 %s102, 4
          %s111 = int_to_ptr.vmem [resolvable:$true] %s110
          %113 = dma.hbm_to_vmem [thread:$0]  %s108, 64, %s111, %s99
        $region20: #{tpu_custom_call.1} parent=15 // pred_fallthru
          _
      $region16: #{tpu_custom_call.1} parent=5 // pred_fallthru
        _
      %p114 = scmp.le.s32.totalorder 1, %s10
      %p115 = scmp.lt.s32.totalorder %s10, 3
      %p116 = pnand %p114, %p115
      %p117 = pneg %p116
      // Predicated region
      $region21: #{tpu_custom_call.1} parent=5 // pred_check
        _
      $region22: #{tpu_custom_call.1} parent=5 // pred_check_branch
        %119 = sbr.rel (%p116) target = $region24
      $region23: #{tpu_custom_call.1} parent=5 // pred_region
        %s120 = ssub.s32 %s10, 1
        %s121 = sand.u32 %s37, 1
        %s122 = scalar_lea.sflag [#allocation3], %s121
        %s123 = sand.u32 %s37, 1
        %s124 = smul.addr %s123, 4
        %s125 = scalar_lea.vmem [#allocation2], %s124
        // Predicated region
        $region25: #{tpu_custom_call.1} parent=23 // pred_check
          %p126 = pneg %p50
        $region26: #{tpu_custom_call.1} parent=23 // pred_check_branch
          %128 = sbr.rel (%p126) target = $region28
        $region27: #{tpu_custom_call.1} parent=23 // pred_region
          %129 = dma.done %s122, 64
        $region28: #{tpu_custom_call.1} parent=23 // pred_fallthru
          _
        %s130 = sand.u32 %s37, 1
        %s131 = scalar_lea.sflag [#allocation3], %s130
        %s132 = sand.u32 %s37, 1
        %s133 = smul.addr %s132, 4
        %s134 = scalar_lea.vmem [#allocation2], %s133
        %p135 = pneg %p50
        %p136 = pneg %p47
        %p137 = pneg %p76
        %p138 = pneg %p73
        %p139 = scmp.lt.s32.totalorder %s19, 1
        %s140 = scalar_select %p139, %s19, 1
        %s141 = smul.addr %s140, 4
        %s142 = scalar_lea.vmem %s1, %s141
        %p143 = scmp.lt.s32.totalorder %s19, 1
        %s144 = scalar_select %p143, %s19, 1
        %s145 = smul.addr %s144, 4
        %s146 = scalar_lea.vmem %s1, %s145
        %p147 = scmp.eq.s32.totalorder %s20, 0
        // Predicated region
        $region29: #{tpu_custom_call.1} parent=23 // pred_check
          %p148 = pneg %p147
        $region30: #{tpu_custom_call.1} parent=23 // pred_check_branch
          %150 = sbr.rel (%p148) target = $region32
        $region31: #{tpu_custom_call.1} parent=23 // pred_region
          %vm151 = vcmask 3072
          %152 = vst.msk [vmem:[%s146] sm:$0xf] %vm151, 0.0
        $region32: #{tpu_custom_call.1} parent=23 // pred_fallthru
          _
        %v153 = vld [vmem:[%s125] sm:$0xf]
        %s154 = smul.u32 %s20, 64
        %v155 = vlaneseq
        %v156 = vand.u32 %v155, 127
        %v157 = vstv %s154
        %v158 = vadd.s32 %v157, %v156
        %vm159 = vcmp.lt.s32.totalorder %v158, 64
        %v160 = vsel %vm159, %v153, 0.0
        %v161 = vld [vmem:[%s146] sm:$0xf]
        %v162 = vmul.f32 %v160, %v160
        %vm163 = vcmask 519168
        %v164 = vsel %vm163, %v162, 0.0
        %165 = vadd.xlane.f32.xlu0 %v164
        %v166 = vpop.xlane.xlu0 %165
        %v167 = vadd.f32 %v161, %v166
        %vm168 = vcmask 3072
        %169 = vst.msk [vmem:[%s146] sm:$0xf] %vm168, %v167
        // Predicated region
        $region33: #{tpu_custom_call.1} parent=23 // pred_check
          %p170 = pneg %p147
        $region34: #{tpu_custom_call.1} parent=23 // pred_check_branch
          %172 = sbr.rel (%p170) target = $region36
        $region35: #{tpu_custom_call.1} parent=23 // pred_region
          %v173 = vld [vmem:[%s146] sm:$0xf]
          %v174 = vrsqrt.pop %v173
          %v175 = vmul.f32 %v173, %v174
          %vm176 = vcmp.eq.f32.partialorder %v173, inf
          %v177 = vsel %vm176, %v173, %v175
          %vm178 = vcmp.eq.f32.partialorder %v173, 0.0
          %v179 = vand.u32 %v173, 2147483648
          %v180 = vsel %vm178, %v179, %v177
          %v181 = vadd.f32 %v180, 1e-12
          %v182 = vrcp.pop %v181
          %v183 = vmul.f32 1.0, %v182
          %184 = vst.msk [vmem:[%s146] sm:$0xf] %vm168, %v183
        $region36: #{tpu_custom_call.1} parent=23 // pred_fallthru
          _
        %p185 = scmp.lt.s32.totalorder %s19, 1
        %s186 = scalar_select %p185, %s19, 1
        %s187 = smul.addr %s186, 4
        %s188 = scalar_lea.vmem %s1, %s187
        // Predicated region
        $region37: #{tpu_custom_call.1} parent=23 // pred_check
          %p189 = pneg %p73
        $region38: #{tpu_custom_call.1} parent=23 // pred_check_branch
          %191 = sbr.rel (%p189) target = $region40
        $region39: #{tpu_custom_call.1} parent=23 // pred_region
          _
        $region40: #{tpu_custom_call.1} parent=23 // pred_fallthru
          _
      $region24: #{tpu_custom_call.1} parent=5 // pred_fallthru
        _
      %p192 = scmp.le.s32.totalorder 2, %s10
      // Predicated region
      $region41: #{tpu_custom_call.1} parent=5 // pred_check
        %p193 = pneg %p192
      $region42: #{tpu_custom_call.1} parent=5 // pred_check_branch
        %195 = sbr.rel (%p193) target = $region44
      $region43: #{tpu_custom_call.1} parent=5 // pred_region
        %s196 = ssub.s32 %s10, 2
        // Predicated region
        $region45: #{tpu_custom_call.1} parent=43 // pred_check
          %p197 = pneg %p79
        $region46: #{tpu_custom_call.1} parent=43 // pred_check_branch
          %199 = sbr.rel (%p197) target = $region48
        $region47: #{tpu_custom_call.1} parent=43 // pred_region
          %p200 = scmp.lt.s32.totalorder %s21, 1
          %s201 = scalar_select %p200, %s21, 1
          %s202 = smul.addr %s201, 4
          %s203 = scalar_lea.vmem %s1, %s202
        $region48: #{tpu_custom_call.1} parent=43 // pred_fallthru
          _
      $region44: #{tpu_custom_call.1} parent=5 // pred_fallthru
        _
    $region6: #{tpu_custom_call.1} parent=1 // loop_footer
      %s14 = sadd.s32 1, %s10
    $region7: #{tpu_custom_call.1} parent=1 // loop_footer_branch
      %9 = sbr.rel target = $region3
    $region8: #{tpu_custom_call.1} parent=1 // loop_exit
      _
    %204 = vsyncpa [#allocation3], 1
    %s205 = scalar_lea.sflag [#allocation3], 1
    %206 = vsyncpa %s205, 1

</llo_original>
